<compile_context>
chip_gen: v6e
topology: v6e:2x2x1
jax: 0.10.0
libtpu: 0.0.40
codegen_flags: <defaults>
</compile_context>

<pallas_src>
import jax
import jax.numpy as jnp
from jax.experimental import pallas as pl
from jax.experimental.pallas import tpu as pltpu


def mlp_kernel(x_ref, w1_ref, bw_ref, b2_ref, o_ref):
    # fc1 on the MXU: (B, D) @ (D, H), f32 accumulation; bias row is bw_ref[0:1, :].
    hidden = jnp.dot(x_ref[...], w1_ref[...], preferred_element_type=jnp.float32)
    hidden = hidden + bw_ref[0:1, :]
    relu = jnp.maximum(hidden, 0.0)

    # fc2: (B, H) @ (H, 1) re-expressed as elementwise mul (VPU) + lane reduce (XLU)
    # against the lane-dense (1, H) fc2 weight row stored in bw_ref[1:2, :].
    out = jnp.sum(relu * bw_ref[1:2, :], axis=-1, keepdims=True)   # (B, 1)
    out = out + b2_ref[0, 0]                                       # scalar bias (SMEM)

    # Exact sigmoid: exp on the EUP, exact divide (single vreg of data -> approx buys nothing).
    o_ref[...] = (1.0 / (1.0 + jnp.exp(-out))).astype(o_ref.dtype)


def prepare_params(w1, b1, w2, b2):
    """One-time packing of parameters into kernel-friendly layouts.

    Returns:
      w1   : (D, H) f32
      bw   : (2, H) f32 -- row 0 = fc1 bias, row 1 = fc2 weight (lane-dense)
      b2_s : (1, 1) f32 -- fc2 bias scalar for SMEM
    """
    H = w1.shape[1]
    bw = jnp.concatenate(
        [jnp.asarray(b1, jnp.float32).reshape(1, H),
         jnp.asarray(w2, jnp.float32).reshape(1, H)],
        axis=0,
    )
    b2_s = jnp.asarray(b2, jnp.float32).reshape(1, 1)
    return jnp.asarray(w1, jnp.float32), bw, b2_s


@jax.jit
def mlp_forward(x, w1, bw, b2_s):
    """x: (B, D); w1: (D, H); bw: (2, H) packed [b1; w2_row]; b2_s: (1, 1)."""
    B = x.shape[0]
    return pl.pallas_call(
        mlp_kernel,
        out_shape=jax.ShapeDtypeStruct((B, 1), jnp.float32),
        in_specs=[
            pl.BlockSpec(memory_space=pltpu.MemorySpace.VMEM),  # x
            pl.BlockSpec(memory_space=pltpu.MemorySpace.VMEM),  # w1
            pl.BlockSpec(memory_space=pltpu.MemorySpace.VMEM),  # packed [b1; w2_row]
            pl.BlockSpec(memory_space=pltpu.MemorySpace.SMEM),  # b2 scalar
        ],
        out_specs=pl.BlockSpec(memory_space=pltpu.MemorySpace.VMEM),
    )(x, w1, bw, b2_s)


def init_params(key, input_size, hidden_size):
    # Deterministic synthetic init (mimics torch.nn.Linear uniform(-1/sqrt(fan_in), +1/sqrt(fan_in)))
    k1, k2, k3, k4 = jax.random.split(key, 4)
    bound1 = 1.0 / jnp.sqrt(input_size)
    bound2 = 1.0 / jnp.sqrt(hidden_size)
    w1 = jax.random.uniform(k1, (input_size, hidden_size), jnp.float32, -bound1, bound1)
    b1 = jax.random.uniform(k2, (1, hidden_size), jnp.float32, -bound1, bound1)
    w2 = jax.random.uniform(k3, (hidden_size, 1), jnp.float32, -bound2, bound2)
    b2 = jax.random.uniform(k4, (1, 1), jnp.float32, -bound2, bound2)
    return w1, b1, w2, b2


if __name__ == "__main__":
    input_size = 32
    hidden_size = 64
    batch = 8

    key = jax.random.PRNGKey(0)
    kx, kp = jax.random.split(key)
    x = jax.random.normal(kx, (batch, input_size), dtype=jnp.float32)
    w1, b1, w2, b2 = init_params(kp, input_size, hidden_size)

    # One-time param prep (hoisted out of the per-call path).
    w1_p, bw_p, b2_p = prepare_params(w1, b1, w2, b2)

    out = mlp_forward(x, w1_p, bw_p, b2_p)
    out = jax.block_until_ready(out)

    # Reference check in plain JAX; exact sigmoid -> tight tolerance.
    ref = jax.nn.sigmoid(jnp.maximum(x @ w1 + b1, 0.0) @ w2 + b2)
    assert out.shape == (batch, 1)
    assert jnp.allclose(out, ref, atol=1e-6, rtol=1e-6)

    print("KERNEL_OK")
</pallas_src>

<mosaic_0001>
module attributes {stable_mosaic.version = 11 : i64} {
  func.func @mlp_kernel(%arg0: memref<8x32xf32, #tpu.memory_space<vmem>>, %arg1: memref<32x64xf32, #tpu.memory_space<vmem>>, %arg2: memref<2x64xf32, #tpu.memory_space<vmem>>, %arg3: memref<1x1xf32, #tpu.memory_space<smem>>, %arg4: memref<8x1xf32, #tpu.memory_space<vmem>>) attributes {dimension_semantics = [], scalar_prefetch = 0 : i64, scratch_operands = 0 : i64, tpu.core_type = #tpu.core_type<tc>} {
    %c0 = arith.constant 0 : index
    %c0_0 = arith.constant 0 : index
    %0 = vector.load %arg0[%c0, %c0_0] : memref<8x32xf32, #tpu.memory_space<vmem>>, vector<8x32xf32>
    %c0_1 = arith.constant 0 : index
    %c0_2 = arith.constant 0 : index
    %1 = vector.load %arg1[%c0_1, %c0_2] : memref<32x64xf32, #tpu.memory_space<vmem>>, vector<32x64xf32>
    %cst = arith.constant dense<0.000000e+00> : vector<8x64xf32>
    %2 = tpu.matmul %0, %1, %cst {dimension_numbers = #tpu.dot_dimension_numbers<[1], [0], [0], [1], [0, 0, 1, 1], [], []>} : vector<8x32xf32>, vector<32x64xf32>, vector<8x64xf32> -> vector<8x64xf32>
    %c0_3 = arith.constant 0 : index
    %c0_4 = arith.constant 0 : index
    %3 = vector.load %arg2[%c0_3, %c0_4] : memref<2x64xf32, #tpu.memory_space<vmem>>, vector<1x64xf32>
    %4 = vector.broadcast %3 : vector<1x64xf32> to vector<8x64xf32>
    %5 = arith.addf %2, %4 : vector<8x64xf32>
    %cst_5 = arith.constant 0.000000e+00 : f32
    %6 = vector.broadcast %cst_5 : f32 to vector<8x64xf32>
    %7 = arith.maximumf %5, %6 : vector<8x64xf32>
    %c1 = arith.constant 1 : index
    %c0_6 = arith.constant 0 : index
    %8 = vector.load %arg2[%c1, %c0_6] : memref<2x64xf32, #tpu.memory_space<vmem>>, vector<1x64xf32>
    %9 = vector.broadcast %8 : vector<1x64xf32> to vector<8x64xf32>
    %10 = arith.mulf %7, %9 : vector<8x64xf32>
    %cst_7 = arith.constant dense<0.000000e+00> : vector<8xf32>
    %11 = vector.multi_reduction <add>, %10, %cst_7 [1] : vector<8x64xf32> to vector<8xf32>
    %12 = vector.shape_cast %11 : vector<8xf32> to vector<8x1xf32>
    %c0_8 = arith.constant 0 : index
    %c0_9 = arith.constant 0 : index
    %13 = memref.load %arg3[%c0_8, %c0_9] : memref<1x1xf32, #tpu.memory_space<smem>>
    %14 = vector.broadcast %13 : f32 to vector<8x1xf32>
    %15 = arith.addf %12, %14 : vector<8x1xf32>
    %cst_10 = arith.constant 0.000000e+00 : f32
    %16 = vector.broadcast %cst_10 : f32 to vector<8x1xf32>
    %17 = arith.subf %16, %15 : vector<8x1xf32>
    %18 = math.exp %17 : vector<8x1xf32>
    %cst_11 = arith.constant 1.000000e+00 : f32
    %19 = vector.broadcast %cst_11 : f32 to vector<8x1xf32>
    %20 = arith.addf %19, %18 : vector<8x1xf32>
    %cst_12 = arith.constant 1.000000e+00 : f32
    %21 = vector.broadcast %cst_12 : f32 to vector<8x1xf32>
    %22 = arith.divf %21, %20 : vector<8x1xf32>
    %c0_13 = arith.constant 0 : index
    %c0_14 = arith.constant 0 : index
    %23 = vector.load %arg4[%c0_13, %c0_14] : memref<8x1xf32, #tpu.memory_space<vmem>>, vector<8x1xf32>
    tpu.vector_store %arg4[%c0_13, %c0_14], %22 {strides = array<i32>} : memref<8x1xf32, #tpu.memory_space<vmem>>, vector<8x1xf32>,
    return
  }
}

</mosaic_0001>

<llo_original>
// kernel: mlp_forward.1
$region0: #{mlp_forward.1}
  #allocation0 [shape = 'u32[]', space=smem, size = 0x4, offset = 0x4, fixed_abs, tag = 'smem constant byte address 0x4 - core index']
  #allocation1 [shape = 'u32[144,128]{1,0:T(1,128)}', space=vmem, size = 0x12000, scoped, tag = 'internal scratch']
  #allocation2 [shape = 'f32[1,1]{1,0:T(1,128)S(6)}', space=smem, size = 0x200, scoped, tag = 'scoped memory for mlp_forward.1']
  %s0 = inlined_call_operand.hbm [shape: f32[8,32], index: 0, kind: input, shape index: {}]
  %s1 = inlined_call_operand.hbm [shape: f32[32,64], index: 1, kind: input, shape index: {}]
  %s2 = inlined_call_operand.vmem [shape: f32[2,64], index: 2, kind: input, shape index: {}]
  %s3 = inlined_call_operand.<no memory space> [shape: f32[1,1], index: 3, kind: input, shape index: {}]
  %s4 = inlined_call_operand.vmem [shape: f32[8,1], index: 4, kind: output, shape index: {}]
  %s5 = sld [smem:[#allocation0]]
  $region34: #{mlp_forward.1} parent=0
    _
  %s7 = ssub.s32 1, %s5
  %s8 = scalar_select 0, %s7, %s5
  %9 = sst [smem:[#allocation2]] %s3
  $region1: #{mlp_forward.1} parent=0
    #allocation3 [shape = 'u8[4096]{0}', space=vmem, size = 0x1000, scoped, tag = 'input window, operand 0, single buffered']
    #allocation4 [shape = 's32[1]{0}', space=sflag, size = 0x4, scoped, tag = 'scoped memory for mlp_forward.1']
    #allocation5 [shape = 'u8[16384]{0}', space=vmem, size = 0x4000, scoped, tag = 'input window, operand 1, single buffered']
    #allocation6 [shape = 's32[1]{0}', space=sflag, size = 0x4, scoped, tag = 'scoped memory for mlp_forward.1']
    %10 = vsyncpa [#allocation4], 0
    %11 = vsyncpa [#allocation6], 0
    // Predicated region
    $region2: #{mlp_forward.1} parent=1 // pred_check
      _
    $region3: #{mlp_forward.1} parent=1 // pred_check_branch
      %13 = sbr.rel (0) target = $region5
    $region4: #{mlp_forward.1} parent=1 // pred_region
      %s15 = ssub.s32 128, 128
      %16 = vsyncadd [#allocation4], %s15
      %s18 = sshll.u32 [#allocation3], 4
      %s19 = int_to_ptr.vmem [resolvable:$true] %s18
      %21 = dma.hbm_to_vmem [thread:$0]  %s0, 128, %s19, [#allocation4]
    $region5: #{mlp_forward.1} parent=1 // pred_fallthru
      _
    // Predicated region
    $region6: #{mlp_forward.1} parent=1 // pred_check
      _
    $region7: #{mlp_forward.1} parent=1 // pred_check_branch
      %23 = sbr.rel (0) target = $region9
    $region8: #{mlp_forward.1} parent=1 // pred_region
      %s25 = ssub.s32 512, 512
      %26 = vsyncadd [#allocation6], %s25
      %s27 = sshll.u32 [#allocation5], 4
      %s28 = int_to_ptr.vmem [resolvable:$true] %s27
      %33 = dma.hbm_to_vmem [thread:$0]  %s1, 512, %s28, [#allocation6], 128, 128, 8
    $region9: #{mlp_forward.1} parent=1 // pred_fallthru
      _
    // Predicated region
    $region10: #{mlp_forward.1} parent=1 // pred_check
      _
    $region11: #{mlp_forward.1} parent=1 // pred_check_branch
      %35 = sbr.rel (0) target = $region13
    $region12: #{mlp_forward.1} parent=1 // pred_region
      _
    $region13: #{mlp_forward.1} parent=1 // pred_fallthru
      _
    // Predicated region
    $region14: #{mlp_forward.1} parent=1 // pred_check
      _
    $region15: #{mlp_forward.1} parent=1 // pred_check_branch
      %37 = sbr.rel (0) target = $region17
    $region16: #{mlp_forward.1} parent=1 // pred_region
      _
    $region17: #{mlp_forward.1} parent=1 // pred_fallthru
      _
    // Predicated region
    $region18: #{mlp_forward.1} parent=1 // pred_check
      _
    $region19: #{mlp_forward.1} parent=1 // pred_check_branch
      %39 = sbr.rel (0) target = $region21
    $region20: #{mlp_forward.1} parent=1 // pred_region
      %40 = dma.done [#allocation4], 128
    $region21: #{mlp_forward.1} parent=1 // pred_fallthru
      _
    // Predicated region
    $region22: #{mlp_forward.1} parent=1 // pred_check
      _
    $region23: #{mlp_forward.1} parent=1 // pred_check_branch
      %42 = sbr.rel (0) target = $region25
    $region24: #{mlp_forward.1} parent=1 // pred_region
      %43 = dma.done [#allocation6], 512
    $region25: #{mlp_forward.1} parent=1 // pred_fallthru
      _
    %v44 = vld [vmem:[#allocation3] sm:$0xff]
    %v45 = vld [vmem:[#allocation5] sm:$0xff]
    %v46 = vld [vmem:[#allocation5 + $0x8] sm:$0xff]
    %v47 = vld [vmem:[#allocation5 + $0x10] sm:$0xff]
    %v48 = vld [vmem:[#allocation5 + $0x18] sm:$0xff]
    %v49 = vld [vmem:[%s2] sm:$0x1]
    %v50 = vlaneseq
    %v51 = vshrl.u32 %v50, 7
    %v52 = vsub.s32 0, %v51
    %v53 = vrot.slane %v49, %v52
    %vm54 = vcmask 261120
    %v56 = vsel %vm54, %v44, 0
    %58 = vmatprep.subr.mxu0 0.0
    %59 = vmatpush1.msra.mxu0 0.0
    %60 = vmatprep.subr.mxu0 0.0
    %61 = vmatpush1.msra.mxu0 0.0
    %62 = vmatprep.subr.mxu0 0.0
    %63 = vmatpush1.msra.mxu0 0.0
    %64 = vmatprep.subr.mxu0 0.0
    %65 = vmatpush1.msra.mxu0 0.0
    %66 = vmatprep.subr.mxu0 0.0
    %67 = vmatpush1.msra.mxu0 0.0
    %68 = vmatprep.subr.mxu0 0.0
    %69 = vmatpush1.msra.mxu0 0.0
    %70 = vmatprep.subr.mxu0 0.0
    %71 = vmatpush1.msra.mxu0 0.0
    %72 = vmatprep.subr.mxu0 0.0
    %73 = vmatpush1.msra.mxu0 0.0
    %74 = vmatprep.subr.mxu0 0.0
    %75 = vmatpush1.msra.mxu0 0.0
    %76 = vmatprep.subr.mxu0 0.0
    %77 = vmatpush1.msra.mxu0 0.0
    %78 = vmatprep.subr.mxu0 0.0
    %79 = vmatpush1.msra.mxu0 0.0
    %80 = vmatprep.subr.mxu0 0.0
    %81 = vmatpush1.msra.mxu0 0.0
    %82 = vmatprep.subr.mxu0 0.0
    %83 = vmatpush1.msra.mxu0 %v48
    %84 = vmatprep.subr.mxu0 0.0
    %85 = vmatpush1.msra.mxu0 %v47
    %86 = vmatprep.subr.mxu0 0.0
    %87 = vmatpush1.msra.mxu0 %v46
    %88 = vmatprep.subr.mxu0 0.0
    %89 = vmatpush1.msra.mxu0 %v45
    %90 = vmatprep.subr.mxu0 0.0
    %91 = vmatpush2.msra.mxu0 0.0
    %92 = vmatprep.subr.mxu0 0.0
    %93 = vmatpush2.msra.mxu0 0.0
    %94 = vmatprep.subr.mxu0 0.0
    %95 = vmatpush2.msra.mxu0 0.0
    %96 = vmatprep.subr.mxu0 0.0
    %97 = vmatpush2.msra.mxu0 0.0
    %98 = vmatprep.subr.mxu0 0.0
    %99 = vmatpush2.msra.mxu0 0.0
    %100 = vmatprep.subr.mxu0 0.0
    %101 = vmatpush2.msra.mxu0 0.0
    %102 = vmatprep.subr.mxu0 0.0
    %103 = vmatpush2.msra.mxu0 0.0
    %104 = vmatprep.subr.mxu0 0.0
    %105 = vmatpush2.msra.mxu0 0.0
    %106 = vmatprep.subr.mxu0 0.0
    %107 = vmatpush2.msra.mxu0 0.0
    %108 = vmatprep.subr.mxu0 0.0
    %109 = vmatpush2.msra.mxu0 0.0
    %110 = vmatprep.subr.mxu0 0.0
    %111 = vmatpush2.msra.mxu0 0.0
    %112 = vmatprep.subr.mxu0 0.0
    %113 = vmatpush2.msra.mxu0 0.0
    %114 = vmatprep.subr.mxu0 0.0
    %115 = vmatpush2.msra.mxu0 0.0
    %116 = vmatprep.subr.mxu0 0.0
    %117 = vmatpush2.msra.mxu0 0.0
    %118 = vmatprep.subr.mxu0 0.0
    %119 = vmatpush2.msra.mxu0 0.0
    %120 = vmatprep.subr.mxu0 0.0
    %121 = vmatpush2.msra.mxu0 0.0
    %122 = vmatprep.mubr.f32.mxu0 0.0
    %123 = vmatmul.mubr.f32.gmra.mxu0 %v56
    %v124 = vpop.f32.mrf.mxu0
    %v125 = vadd.f32 %v53, %v124
    %v126 = vpop.f32.mrf.mxu0
    %127 = vdwg.mxu0
    %v128 = vmax.f32 %v125, 0.0
    %v129 = vld [vmem:[%s2 + $0x1] sm:$0x1]
    %v130 = vlaneseq
    %v131 = vshrl.u32 %v130, 7
    %v132 = vsub.s32 0, %v131
    %v133 = vrot.slane %v129, %v132
    %v134 = vmul.f32 %v128, %v133
    %vm135 = vcmask 523264
    %v136 = vsel %vm135, %v134, 0.0
    %137 = vadd.xlane.f32.xlu0 %v136
    %v138 = vpop.xlane.xlu0 %137
    %s139 = sld [smem:[#allocation2]]
    %v140 = vstv %s139
    %v141 = vadd.f32 %v138, %v140
    %v142 = vsub.f32 0.0, %v141
    %v143 = vmul.f32 %v142, 1.442695
    %v144 = vpow.pop %v143
    %v145 = vadd.f32 %v144, 1.0
    %v146 = vrcp.pop %v145
    %v147 = vmul.f32 1.0, %v146
    %vm148 = vcmask 7168
    %149 = vst.msk [vmem:[%s4] sm:$0xff] %vm148, %v147
    // Predicated region
    $region26: #{mlp_forward.1} parent=1 // pred_check
      _
    $region27: #{mlp_forward.1} parent=1 // pred_check_branch
      %151 = sbr.rel (0) target = $region29
    $region28: #{mlp_forward.1} parent=1 // pred_region
      _
    $region29: #{mlp_forward.1} parent=1 // pred_fallthru
      _
    // Predicated region
    $region30: #{mlp_forward.1} parent=1 // pred_check
      _
    $region31: #{mlp_forward.1} parent=1 // pred_check_branch
      %153 = sbr.rel (0) target = $region33
    $region32: #{mlp_forward.1} parent=1 // pred_region
      _
    $region33: #{mlp_forward.1} parent=1 // pred_fallthru
      _
    %154 = vsyncpa [#allocation4], 1
    %155 = vsyncpa [#allocation6], 1

</llo_original>
